<compile_context>
chip_gen: v7x
topology: tpu7x:2x2x1
jax: 0.10.0
libtpu: 0.0.40
codegen_flags: <defaults>
</compile_context>

<pallas_src>
import functools

import jax
import jax.numpy as jnp
from jax.experimental import pallas as pl
from jax.experimental.pallas import tpu as pltpu


def _round_up(x, m):
    return ((x + m - 1) // m) * m


def _layernorm(x, w, b, eps=1e-5):
    # one-pass variance (mean(x*x) - mu*mu): the two cross-lane reductions are
    # independent so the XLU passes can overlap.
    mu = jnp.mean(x, axis=-1, keepdims=True)
    var = jnp.mean(x * x, axis=-1, keepdims=True) - mu * mu
    return (x - mu) * jax.lax.rsqrt(var + eps) * w + b


# static row indices inside the resident (8 + 4*N, H) bias / LayerNorm slab
_ROW_FC1_B, _ROW_LN1_W, _ROW_LN1_B = 0, 1, 2
_ROW_FC2_B, _ROW_LN2_W, _ROW_LN2_B = 3, 4, 5
_ROW_LNR_W, _ROW_LNR_B = 6, 7
_GRU_ROWS0 = 8          # per layer l: base = 8 + 4*l -> [br, bz, bnx, bnh]


def r_actor_kernel(
    # per-batch-tile inputs
    obs_ref, h_ref, mask_ref, avail_ref,
    # resident parameters
    ln0_ref, fc1w_ref, fc2w_ref, vec_ref,
    wr_ref, wz_ref, wnx_ref, wnh_ref, actw_ref, actb_ref,
    # packed lane-dense output slab
    out_ref,
    *, n_rnn_layers,
):
    f32 = jnp.float32
    cd = fc1w_ref.dtype                       # matmul operand dtype (bf16)
    H = wnx_ref.shape[-1]

    def mm(a_bf, w):                          # MXU matmul, f32 accumulation
        return jnp.dot(a_bf, w, preferred_element_type=f32)

    def vrow(i):                              # static (1, H) row of bias slab
        return vec_ref[i:i + 1, :]

    # ---------------- MLPBase ----------------
    x = _layernorm(obs_ref[...], ln0_ref[0:1, :], ln0_ref[1:2, :])   # feat_norm
    x = jnp.tanh(mm(x.astype(cd), fc1w_ref[...]) + vrow(_ROW_FC1_B))
    x = _layernorm(x, vrow(_ROW_LN1_W), vrow(_ROW_LN1_B))            # fc1
    x = jnp.tanh(mm(x.astype(cd), fc2w_ref[...]) + vrow(_ROW_FC2_B))
    x = _layernorm(x, vrow(_ROW_LN2_W), vrow(_ROW_LN2_B))            # fc2[0]

    # ------------- RNNLayer: single-step multi-layer GRU -------------
    mask = mask_ref[...]                                             # (TB, 1)
    h_layers = []
    for l in range(n_rnn_layers):                                    # static unroll
        h = h_ref[l] * mask                                          # (TB, H)
        x_bf = x.astype(cd)                                          # hoisted casts
        h_bf = h.astype(cd)
        xh_bf = jnp.concatenate([x_bf, h_bf], axis=-1)               # (TB, 2H)
        base = _GRU_ROWS0 + 4 * l
        # K-concat fused r/z matmuls: [x|h] @ [Wx;Wh]  (4 matmuls/layer total)
        r = jax.nn.sigmoid(mm(xh_bf, wr_ref[l]) + vrow(base + 0))
        z = jax.nn.sigmoid(mm(xh_bf, wz_ref[l]) + vrow(base + 1))
        n = jnp.tanh(mm(x_bf, wnx_ref[l]) + vrow(base + 2)
                     + r * (mm(h_bf, wnh_ref[l]) + vrow(base + 3)))
        h_new = (1.0 - z) * n + z * h
        h_layers.append(h_new)
        x = h_new
    x = _layernorm(x, vrow(_ROW_LNR_W), vrow(_ROW_LNR_B))            # rnn.norm

    # ---------------- ACTLayer (Discrete, deterministic) ----------------
    # action dim is padded to a multiple of 128 in the wrapper; padded lanes
    # have avail == 0 so they land at -1e10 and never win / never contribute.
    logits = mm(x.astype(cd), actw_ref[...]) + actb_ref[...]         # (TB, A_pad)
    logits = jnp.where(avail_ref[...] == 0.0, jnp.float32(-1e10), logits)

    A = logits.shape[-1]
    ids = jax.lax.broadcasted_iota(jnp.int32, logits.shape, 1)
    max_l = jnp.max(logits, axis=-1, keepdims=True)
    # argmax with first-occurrence tie-breaking (torch argmax semantics)
    action = jnp.min(jnp.where(logits >= max_l, ids, A),
                     axis=-1, keepdims=True)                         # (TB, 1)
    shifted = logits - max_l
    lse = jnp.log(jnp.sum(jnp.exp(shifted), axis=-1, keepdims=True))
    logp = jnp.sum(jnp.where(ids == action, shifted - lse, 0.0),
                   axis=-1, keepdims=True)                           # (TB, 1)

    # -------- packed lane-dense output slab (single output stream) --------
    # lane 0 = action (exact in f32 for A < 2^24), lane 1 = logp,
    # lanes [2, 2 + N*H) = new hidden state, remaining lanes zero.
    h_cat = h_layers[0] if n_rnn_layers == 1 else jnp.concatenate(h_layers, -1)
    used = 2 + n_rnn_layers * H
    pieces = [action.astype(f32), logp, h_cat]
    pad = out_ref.shape[-1] - used
    if pad:
        pieces.append(jnp.zeros((h_cat.shape[0], pad), f32))
    out_ref[...] = jnp.concatenate(pieces, axis=-1)


def _prepare_params(params, compute_dtype, act_pad):
    """Host-side prep: fuse GRU r/z weights along the contraction axis,
    pre-sum the r/z biases, pack the width-H bias/LN vectors into one resident
    slab, pad the action dim to `act_pad`, cast matmul weights to bf16."""
    H = params["fc1_w"].shape[1]
    cd = compute_dtype
    wih, whh = params["gru_wih"], params["gru_whh"]    # (N, H, 3H), gates [r|z|n]
    bih, bhh = params["gru_bih"], params["gru_bhh"]    # (N, 1, 3H)
    N = wih.shape[0]

    wrx, wzx, wnx = wih[:, :, 0:H], wih[:, :, H:2 * H], wih[:, :, 2 * H:3 * H]
    wrh, wzh, wnh = whh[:, :, 0:H], whh[:, :, H:2 * H], whh[:, :, 2 * H:3 * H]
    w_r = jnp.concatenate([wrx, wrh], axis=1).astype(cd)   # (N, 2H, H)
    w_z = jnp.concatenate([wzx, wzh], axis=1).astype(cd)   # (N, 2H, H)

    br = bih[:, :, 0:H] + bhh[:, :, 0:H]
    bz = bih[:, :, H:2 * H] + bhh[:, :, H:2 * H]
    bnx = bih[:, :, 2 * H:3 * H]
    bnh = bhh[:, :, 2 * H:3 * H]

    rows = [params["fc1_b"], params["ln1_w"], params["ln1_b"],
            params["fc2_b"], params["ln2_w"], params["ln2_b"],
            params["lnr_w"], params["lnr_b"]]
    for l in range(N):
        rows += [br[l], bz[l], bnx[l], bnh[l]]
    vec = jnp.concatenate([r.reshape(1, H) for r in rows], axis=0)   # (8+4N, H)

    ln0 = jnp.concatenate([params["ln0_w"].reshape(1, -1),
                           params["ln0_b"].reshape(1, -1)], axis=0)  # (2, obs)

    A = params["act_w"].shape[1]
    act_w = jnp.pad(params["act_w"], ((0, 0), (0, act_pad - A)))
    act_b = jnp.pad(params["act_b"], ((0, 0), (0, act_pad - A)))

    return dict(
        ln0=ln0,
        fc1_w=params["fc1_w"].astype(cd),
        fc2_w=params["fc2_w"].astype(cd),
        vec=vec,
        w_r=w_r, w_z=w_z,
        wnx=wnx.astype(cd), wnh=wnh.astype(cd),
        act_w=act_w.astype(cd), act_b=act_b,
    )


def r_actor_forward(params, obs, rnn_states, masks, available_actions=None,
                    *, batch_tile=1024, compute_dtype=jnp.bfloat16):
    """obs: (B, obs_dim); rnn_states: (B, N, H); masks: (B, 1); avail: (B, A)."""
    B, obs_dim = obs.shape
    N = rnn_states.shape[1]
    H = params["fc1_w"].shape[1]
    A = params["act_w"].shape[1]
    A_pad = _round_up(A, 128)
    PACK = _round_up(2 + N * H, 128)

    if available_actions is None:
        available_actions = jnp.ones((B, A), jnp.float32)

    # Batch tile: single sublane-aligned tile for small B; otherwise lane-
    # aligned tiles, capped so the grid has >= 2 steps (v7x megacore) and at
    # most `batch_tile` rows per step.
    if B <= 256:
        TB = _round_up(B, 8)
    else:
        half = _round_up(-(-B // 2), 128)
        TB = max(128, min(_round_up(batch_tile, 128), half))
    B_pad = _round_up(B, TB)

    obs_p = jnp.pad(obs.astype(jnp.float32), ((0, B_pad - B), (0, 0)))
    mask_p = jnp.pad(masks.astype(jnp.float32), ((0, B_pad - B), (0, 0)))
    avail_p = jnp.pad(available_actions.astype(jnp.float32),
                      ((0, B_pad - B), (0, A_pad - A)))       # zero-pad lanes
    # layer-major hidden state (N, B_pad, H); cheap transpose for N == 1
    h_in = jnp.pad(jnp.transpose(rnn_states.astype(jnp.float32), (1, 0, 2)),
                   ((0, 0), (0, B_pad - B), (0, 0)))

    prep = _prepare_params(params, compute_dtype, A_pad)
    weights = (prep["ln0"], prep["fc1_w"], prep["fc2_w"], prep["vec"],
               prep["w_r"], prep["w_z"], prep["wnx"], prep["wnh"],
               prep["act_w"], prep["act_b"])

    def resident(a):                      # weights: same block every grid step
        nd = a.ndim
        return pl.BlockSpec(a.shape, lambda i, _nd=nd: (0,) * _nd)

    in_specs = [
        pl.BlockSpec((TB, obs_dim), lambda i: (i, 0)),        # obs
        pl.BlockSpec((N, TB, H), lambda i: (0, i, 0)),        # hidden states
        pl.BlockSpec((TB, 1), lambda i: (i, 0)),              # masks
        pl.BlockSpec((TB, A_pad), lambda i: (i, 0)),          # available_actions
    ] + [resident(w) for w in weights]

    kernel = functools.partial(r_actor_kernel, n_rnn_layers=N)

    slab = pl.pallas_call(
        kernel,
        grid=(B_pad // TB,),
        in_specs=in_specs,
        out_specs=pl.BlockSpec((TB, PACK), lambda i: (i, 0)),
        out_shape=jax.ShapeDtypeStruct((B_pad, PACK), jnp.float32),
        compiler_params=pltpu.CompilerParams(
            dimension_semantics=("parallel",),
            vmem_limit_bytes=32 * 1024 * 1024),
    )(obs_p, h_in, mask_p, avail_p, *weights)

    actions = slab[:B, 0:1].astype(jnp.int32)
    logp = slab[:B, 1:2]
    new_rnn_states = slab[:B, 2:2 + N * H].reshape(B, N, H)
    return actions, logp, new_rnn_states


# ---------------- deterministic parameter construction ----------------
def make_params(key, obs_dim, hidden, action_dim, n_rnn):
    ks = jax.random.split(key, 10)

    def lin(k, fan_in, fan_out):
        return (jax.random.normal(k, (fan_in, fan_out), jnp.float32)
                / jnp.sqrt(jnp.float32(fan_in)))

    return {
        "ln0_w": jnp.ones((1, obs_dim), jnp.float32),
        "ln0_b": jnp.zeros((1, obs_dim), jnp.float32),
        "fc1_w": lin(ks[0], obs_dim, hidden),
        "fc1_b": jnp.zeros((1, hidden), jnp.float32),
        "ln1_w": jnp.ones((1, hidden), jnp.float32),
        "ln1_b": jnp.zeros((1, hidden), jnp.float32),
        "fc2_w": lin(ks[1], hidden, hidden),
        "fc2_b": jnp.zeros((1, hidden), jnp.float32),
        "ln2_w": jnp.ones((1, hidden), jnp.float32),
        "ln2_b": jnp.zeros((1, hidden), jnp.float32),
        # GRU, gate order [r, z, n], weights stored [in, 3H] per layer
        "gru_wih": (jax.random.normal(ks[2], (n_rnn, hidden, 3 * hidden), jnp.float32)
                    / jnp.sqrt(jnp.float32(hidden))),
        "gru_whh": (jax.random.normal(ks[3], (n_rnn, hidden, 3 * hidden), jnp.float32)
                    / jnp.sqrt(jnp.float32(hidden))),
        "gru_bih": 0.1 * jax.random.normal(ks[4], (n_rnn, 1, 3 * hidden), jnp.float32),
        "gru_bhh": 0.1 * jax.random.normal(ks[5], (n_rnn, 1, 3 * hidden), jnp.float32),
        "lnr_w": jnp.ones((1, hidden), jnp.float32),
        "lnr_b": jnp.zeros((1, hidden), jnp.float32),
        "act_w": lin(ks[6], hidden, action_dim),
        "act_b": jnp.zeros((1, action_dim), jnp.float32),
    }


# ---------------- pure-JAX reference (mirrors the kernel math) ----------------
def r_actor_reference(params, obs, rnn_states, masks, avail,
                      compute_dtype=jnp.bfloat16):
    H = params["fc1_w"].shape[1]
    A = params["act_w"].shape[1]
    N = rnn_states.shape[1]
    prep = _prepare_params(params, compute_dtype, _round_up(A, 128))
    cd = prep["fc1_w"].dtype
    f32 = jnp.float32
    vec = prep["vec"]

    def vrow(i):
        return vec[i:i + 1, :]

    def mm(a_bf, w):
        return jnp.dot(a_bf, w, preferred_element_type=f32)

    x = _layernorm(obs.astype(f32), prep["ln0"][0:1, :], prep["ln0"][1:2, :])
    x = jnp.tanh(mm(x.astype(cd), prep["fc1_w"]) + vrow(_ROW_FC1_B))
    x = _layernorm(x, vrow(_ROW_LN1_W), vrow(_ROW_LN1_B))
    x = jnp.tanh(mm(x.astype(cd), prep["fc2_w"]) + vrow(_ROW_FC2_B))
    x = _layernorm(x, vrow(_ROW_LN2_W), vrow(_ROW_LN2_B))

    h_all = []
    for l in range(N):
        h = rnn_states[:, l, :].astype(f32) * masks
        x_bf = x.astype(cd)
        h_bf = h.astype(cd)
        xh_bf = jnp.concatenate([x_bf, h_bf], axis=-1)
        base = _GRU_ROWS0 + 4 * l
        r = jax.nn.sigmoid(mm(xh_bf, prep["w_r"][l]) + vrow(base + 0))
        z = jax.nn.sigmoid(mm(xh_bf, prep["w_z"][l]) + vrow(base + 1))
        n = jnp.tanh(mm(x_bf, prep["wnx"][l]) + vrow(base + 2)
                     + r * (mm(h_bf, prep["wnh"][l]) + vrow(base + 3)))
        h_new = (1.0 - z) * n + z * h
        h_all.append(h_new)
        x = h_new
    x = _layernorm(x, vrow(_ROW_LNR_W), vrow(_ROW_LNR_B))

    logits = mm(x.astype(cd), prep["act_w"][:, :A]) + prep["act_b"][:, :A]
    logits = jnp.where(avail == 0.0, jnp.float32(-1e10), logits)
    action = jnp.argmax(logits, axis=-1, keepdims=True).astype(jnp.int32)
    max_l = jnp.max(logits, axis=-1, keepdims=True)
    shifted = logits - max_l
    lse = jnp.log(jnp.sum(jnp.exp(shifted), axis=-1, keepdims=True))
    logp = jnp.take_along_axis(shifted - lse, action, axis=-1)
    return action, logp, jnp.stack(h_all, axis=1)


if __name__ == "__main__":
    B, OBS, H, A, N = 8, 32, 32, 8, 1   # batch, obs_dim, hidden, n_actions, recurrent_N
    ATOL = RTOL = 2e-3                  # bf16 matmul operands -> bf16-scale tolerance

    root = jax.random.PRNGKey(0)
    k_par, k_obs, k_h, k_m = jax.random.split(root, 4)

    params = make_params(k_par, OBS, H, A, N)
    obs = jax.random.normal(k_obs, (B, OBS), jnp.float32)
    rnn_states = jax.random.normal(k_h, (B, N, H), jnp.float32)
    masks = (jax.random.uniform(k_m, (B, 1)) > 0.3).astype(jnp.float32)
    avail = jnp.ones((B, A), jnp.float32).at[:, 3].set(0.0)   # mask one action

    actions, logp, new_h = r_actor_forward(params, obs, rnn_states, masks, avail)
    jax.block_until_ready((actions, logp, new_h))

    a_ref, lp_ref, h_ref = r_actor_reference(params, obs, rnn_states, masks, avail)
    assert actions.shape == (B, 1) and logp.shape == (B, 1) and new_h.shape == (B, N, H)
    assert jnp.all(actions == a_ref), "action mismatch vs reference"
    assert jnp.allclose(logp, lp_ref, atol=ATOL, rtol=RTOL), "log-prob mismatch"
    assert jnp.allclose(new_h, h_ref, atol=ATOL, rtol=RTOL), "rnn state mismatch"

    # Second check: multi-tile grid + batch/action padding path (grid = 3 steps).
    B2 = 300
    k2o, k2h, k2m, k2a = jax.random.split(jax.random.PRNGKey(1), 4)
    obs2 = jax.random.normal(k2o, (B2, OBS), jnp.float32)
    h2 = jax.random.normal(k2h, (B2, N, H), jnp.float32)
    m2 = (jax.random.uniform(k2m, (B2, 1)) > 0.3).astype(jnp.float32)
    av2 = (jax.random.uniform(k2a, (B2, A)) > 0.2).astype(jnp.float32)
    av2 = av2.at[:, 0].set(1.0)   # ensure >= 1 available action per row
    a2, lp2, nh2 = r_actor_forward(params, obs2, h2, m2, av2, batch_tile=128)
    jax.block_until_ready((a2, lp2, nh2))
    a2r, lp2r, nh2r = r_actor_reference(params, obs2, h2, m2, av2)
    assert jnp.all(a2 == a2r), "action mismatch (tiled path)"
    assert jnp.allclose(lp2, lp2r, atol=ATOL, rtol=RTOL), "log-prob mismatch (tiled path)"
    assert jnp.allclose(nh2, nh2r, atol=ATOL, rtol=RTOL), "rnn state mismatch (tiled path)"

    # Third check: default batch_tile exercises the ">= 2 grid steps" cap (grid = 2).
    a3, lp3, nh3 = r_actor_forward(params, obs2, h2, m2, av2)
    jax.block_until_ready((a3, lp3, nh3))
    assert jnp.all(a3 == a2r), "action mismatch (2-step grid)"
    assert jnp.allclose(lp3, lp2r, atol=ATOL, rtol=RTOL), "log-prob mismatch (2-step grid)"
    assert jnp.allclose(nh3, nh2r, atol=ATOL, rtol=RTOL), "rnn state mismatch (2-step grid)"

    print("KERNEL_OK")
</pallas_src>

<mosaic_0001>
module attributes {stable_mosaic.version = 11 : i64} {
  func.func @r_actor_kernel(%arg0: i32, %arg1: memref<8x32xf32, #tpu.memory_space<vmem>>, %arg2: memref<1x8x32xf32, #tpu.memory_space<vmem>>, %arg3: memref<8x1xf32, #tpu.memory_space<vmem>>, %arg4: memref<8x128xf32, #tpu.memory_space<vmem>>, %arg5: memref<2x32xf32, #tpu.memory_space<vmem>>, %arg6: memref<32x32xbf16, #tpu.memory_space<vmem>>, %arg7: memref<32x32xbf16, #tpu.memory_space<vmem>>, %arg8: memref<12x32xf32, #tpu.memory_space<vmem>>, %arg9: memref<1x64x32xbf16, #tpu.memory_space<vmem>>, %arg10: memref<1x64x32xbf16, #tpu.memory_space<vmem>>, %arg11: memref<1x32x32xbf16, #tpu.memory_space<vmem>>, %arg12: memref<1x32x32xbf16, #tpu.memory_space<vmem>>, %arg13: memref<32x128xbf16, #tpu.memory_space<vmem>>, %arg14: memref<1x128xf32, #tpu.memory_space<vmem>>, %arg15: memref<8x128xf32, #tpu.memory_space<vmem>>) attributes {dimension_semantics = [#tpu.dimension_semantics<parallel>], iteration_bounds = array<i64: 1>, scalar_prefetch = 0 : i64, scratch_operands = 0 : i64, tpu.core_type = #tpu.core_type<tc>, window_params = [{transform_indices = @transform_0, window_bounds = array<i64: 8, 32>}, {transform_indices = @transform_1, window_bounds = array<i64: 1, 8, 32>}, {transform_indices = @transform_2, window_bounds = array<i64: 8, 1>}, {transform_indices = @transform_3, window_bounds = array<i64: 8, 128>}, {pipeline_mode = #tpu.pipeline_mode<synchronous>, transform_indices = @transform_4, window_bounds = array<i64: 2, 32>}, {pipeline_mode = #tpu.pipeline_mode<synchronous>, transform_indices = @transform_5, window_bounds = array<i64: 32, 32>}, {pipeline_mode = #tpu.pipeline_mode<synchronous>, transform_indices = @transform_6, window_bounds = array<i64: 32, 32>}, {pipeline_mode = #tpu.pipeline_mode<synchronous>, transform_indices = @transform_7, window_bounds = array<i64: 12, 32>}, {pipeline_mode = #tpu.pipeline_mode<synchronous>, transform_indices = @transform_8, window_bounds = array<i64: 1, 64, 32>}, {pipeline_mode = #tpu.pipeline_mode<synchronous>, transform_indices = @transform_9, window_bounds = array<i64: 1, 64, 32>}, {pipeline_mode = #tpu.pipeline_mode<synchronous>, transform_indices = @transform_10, window_bounds = array<i64: 1, 32, 32>}, {pipeline_mode = #tpu.pipeline_mode<synchronous>, transform_indices = @transform_11, window_bounds = array<i64: 1, 32, 32>}, {pipeline_mode = #tpu.pipeline_mode<synchronous>, transform_indices = @transform_12, window_bounds = array<i64: 32, 128>}, {pipeline_mode = #tpu.pipeline_mode<synchronous>, transform_indices = @transform_13, window_bounds = array<i64: 1, 128>}, {transform_indices = @transform_14, window_bounds = array<i64: 8, 128>}]} {
    %c0 = arith.constant 0 : index
    %c0_0 = arith.constant 0 : index
    %0 = vector.load %arg1[%c0, %c0_0] : memref<8x32xf32, #tpu.memory_space<vmem>>, vector<8x32xf32>
    %c0_1 = arith.constant 0 : index
    %c0_2 = arith.constant 0 : index
    %1 = vector.load %arg5[%c0_1, %c0_2] : memref<2x32xf32, #tpu.memory_space<vmem>>, vector<1x32xf32>
    %c1 = arith.constant 1 : index
    %c0_3 = arith.constant 0 : index
    %2 = vector.load %arg5[%c1, %c0_3] : memref<2x32xf32, #tpu.memory_space<vmem>>, vector<1x32xf32>
    %cst = arith.constant dense<0.000000e+00> : vector<8xf32>
    %3 = vector.multi_reduction <add>, %0, %cst [1] : vector<8x32xf32> to vector<8xf32>
    %4 = vector.shape_cast %3 : vector<8xf32> to vector<8x1xf32>
    %cst_4 = arith.constant 3.200000e+01 : f32
    %5 = vector.broadcast %cst_4 : f32 to vector<8x1xf32>
    %6 = arith.divf %4, %5 : vector<8x1xf32>
    %7 = arith.mulf %0, %0 : vector<8x32xf32>
    %cst_5 = arith.constant dense<0.000000e+00> : vector<8xf32>
    %8 = vector.multi_reduction <add>, %7, %cst_5 [1] : vector<8x32xf32> to vector<8xf32>
    %9 = vector.shape_cast %8 : vector<8xf32> to vector<8x1xf32>
    %cst_6 = arith.constant 3.200000e+01 : f32
    %10 = vector.broadcast %cst_6 : f32 to vector<8x1xf32>
    %11 = arith.divf %9, %10 : vector<8x1xf32>
    %12 = arith.mulf %6, %6 : vector<8x1xf32>
    %13 = arith.subf %11, %12 : vector<8x1xf32>
    %14 = vector.broadcast %6 : vector<8x1xf32> to vector<8x32xf32>
    %15 = arith.subf %0, %14 : vector<8x32xf32>
    %cst_7 = arith.constant 9.99999974E-6 : f32
    %16 = vector.broadcast %cst_7 : f32 to vector<8x1xf32>
    %17 = arith.addf %13, %16 : vector<8x1xf32>
    %18 = math.rsqrt %17 : vector<8x1xf32>
    %19 = vector.broadcast %18 : vector<8x1xf32> to vector<8x32xf32>
    %20 = arith.mulf %15, %19 : vector<8x32xf32>
    %21 = vector.broadcast %1 : vector<1x32xf32> to vector<8x32xf32>
    %22 = arith.mulf %20, %21 : vector<8x32xf32>
    %23 = vector.broadcast %2 : vector<1x32xf32> to vector<8x32xf32>
    %24 = arith.addf %22, %23 : vector<8x32xf32>
    %25 = arith.truncf %24 : vector<8x32xf32> to vector<8x32xbf16>
    %c0_8 = arith.constant 0 : index
    %c0_9 = arith.constant 0 : index
    %26 = vector.load %arg6[%c0_8, %c0_9] : memref<32x32xbf16, #tpu.memory_space<vmem>>, vector<32x32xbf16>
    %cst_10 = arith.constant dense<0.000000e+00> : vector<8x32xf32>
    %27 = tpu.matmul %25, %26, %cst_10 {dimension_numbers = #tpu.dot_dimension_numbers<[1], [0], [0], [1], [0, 0, 1, 1], [], []>} : vector<8x32xbf16>, vector<32x32xbf16>, vector<8x32xf32> -> vector<8x32xf32>
    %c0_11 = arith.constant 0 : index
    %c0_12 = arith.constant 0 : index
    %28 = vector.load %arg8[%c0_11, %c0_12] : memref<12x32xf32, #tpu.memory_space<vmem>>, vector<1x32xf32>
    %29 = vector.broadcast %28 : vector<1x32xf32> to vector<8x32xf32>
    %30 = arith.addf %27, %29 : vector<8x32xf32>
    %31 = math.tanh %30 : vector<8x32xf32>
    %c1_13 = arith.constant 1 : index
    %c0_14 = arith.constant 0 : index
    %32 = vector.load %arg8[%c1_13, %c0_14] : memref<12x32xf32, #tpu.memory_space<vmem>>, vector<1x32xf32>
    %c2 = arith.constant 2 : index
    %c0_15 = arith.constant 0 : index
    %33 = vector.load %arg8[%c2, %c0_15] : memref<12x32xf32, #tpu.memory_space<vmem>>, vector<1x32xf32>
    %cst_16 = arith.constant dense<0.000000e+00> : vector<8xf32>
    %34 = vector.multi_reduction <add>, %31, %cst_16 [1] : vector<8x32xf32> to vector<8xf32>
    %35 = vector.shape_cast %34 : vector<8xf32> to vector<8x1xf32>
    %cst_17 = arith.constant 3.200000e+01 : f32
    %36 = vector.broadcast %cst_17 : f32 to vector<8x1xf32>
    %37 = arith.divf %35, %36 : vector<8x1xf32>
    %38 = arith.mulf %31, %31 : vector<8x32xf32>
    %cst_18 = arith.constant dense<0.000000e+00> : vector<8xf32>
    %39 = vector.multi_reduction <add>, %38, %cst_18 [1] : vector<8x32xf32> to vector<8xf32>
    %40 = vector.shape_cast %39 : vector<8xf32> to vector<8x1xf32>
    %cst_19 = arith.constant 3.200000e+01 : f32
    %41 = vector.broadcast %cst_19 : f32 to vector<8x1xf32>
    %42 = arith.divf %40, %41 : vector<8x1xf32>
    %43 = arith.mulf %37, %37 : vector<8x1xf32>
    %44 = arith.subf %42, %43 : vector<8x1xf32>
    %45 = vector.broadcast %37 : vector<8x1xf32> to vector<8x32xf32>
    %46 = arith.subf %31, %45 : vector<8x32xf32>
    %cst_20 = arith.constant 9.99999974E-6 : f32
    %47 = vector.broadcast %cst_20 : f32 to vector<8x1xf32>
    %48 = arith.addf %44, %47 : vector<8x1xf32>
    %49 = math.rsqrt %48 : vector<8x1xf32>
    %50 = vector.broadcast %49 : vector<8x1xf32> to vector<8x32xf32>
    %51 = arith.mulf %46, %50 : vector<8x32xf32>
    %52 = vector.broadcast %32 : vector<1x32xf32> to vector<8x32xf32>
    %53 = arith.mulf %51, %52 : vector<8x32xf32>
    %54 = vector.broadcast %33 : vector<1x32xf32> to vector<8x32xf32>
    %55 = arith.addf %53, %54 : vector<8x32xf32>
    %56 = arith.truncf %55 : vector<8x32xf32> to vector<8x32xbf16>
    %c0_21 = arith.constant 0 : index
    %c0_22 = arith.constant 0 : index
    %57 = vector.load %arg7[%c0_21, %c0_22] : memref<32x32xbf16, #tpu.memory_space<vmem>>, vector<32x32xbf16>
    %cst_23 = arith.constant dense<0.000000e+00> : vector<8x32xf32>
    %58 = tpu.matmul %56, %57, %cst_23 {dimension_numbers = #tpu.dot_dimension_numbers<[1], [0], [0], [1], [0, 0, 1, 1], [], []>} : vector<8x32xbf16>, vector<32x32xbf16>, vector<8x32xf32> -> vector<8x32xf32>
    %c3 = arith.constant 3 : index
    %c0_24 = arith.constant 0 : index
    %59 = vector.load %arg8[%c3, %c0_24] : memref<12x32xf32, #tpu.memory_space<vmem>>, vector<1x32xf32>
    %60 = vector.broadcast %59 : vector<1x32xf32> to vector<8x32xf32>
    %61 = arith.addf %58, %60 : vector<8x32xf32>
    %62 = math.tanh %61 : vector<8x32xf32>
    %c4 = arith.constant 4 : index
    %c0_25 = arith.constant 0 : index
    %63 = vector.load %arg8[%c4, %c0_25] : memref<12x32xf32, #tpu.memory_space<vmem>>, vector<1x32xf32>
    %c5 = arith.constant 5 : index
    %c0_26 = arith.constant 0 : index
    %64 = vector.load %arg8[%c5, %c0_26] : memref<12x32xf32, #tpu.memory_space<vmem>>, vector<1x32xf32>
    %cst_27 = arith.constant dense<0.000000e+00> : vector<8xf32>
    %65 = vector.multi_reduction <add>, %62, %cst_27 [1] : vector<8x32xf32> to vector<8xf32>
    %66 = vector.shape_cast %65 : vector<8xf32> to vector<8x1xf32>
    %cst_28 = arith.constant 3.200000e+01 : f32
    %67 = vector.broadcast %cst_28 : f32 to vector<8x1xf32>
    %68 = arith.divf %66, %67 : vector<8x1xf32>
    %69 = arith.mulf %62, %62 : vector<8x32xf32>
    %cst_29 = arith.constant dense<0.000000e+00> : vector<8xf32>
    %70 = vector.multi_reduction <add>, %69, %cst_29 [1] : vector<8x32xf32> to vector<8xf32>
    %71 = vector.shape_cast %70 : vector<8xf32> to vector<8x1xf32>
    %cst_30 = arith.constant 3.200000e+01 : f32
    %72 = vector.broadcast %cst_30 : f32 to vector<8x1xf32>
    %73 = arith.divf %71, %72 : vector<8x1xf32>
    %74 = arith.mulf %68, %68 : vector<8x1xf32>
    %75 = arith.subf %73, %74 : vector<8x1xf32>
    %76 = vector.broadcast %68 : vector<8x1xf32> to vector<8x32xf32>
    %77 = arith.subf %62, %76 : vector<8x32xf32>
    %cst_31 = arith.constant 9.99999974E-6 : f32
    %78 = vector.broadcast %cst_31 : f32 to vector<8x1xf32>
    %79 = arith.addf %75, %78 : vector<8x1xf32>
    %80 = math.rsqrt %79 : vector<8x1xf32>
    %81 = vector.broadcast %80 : vector<8x1xf32> to vector<8x32xf32>
    %82 = arith.mulf %77, %81 : vector<8x32xf32>
    %83 = vector.broadcast %63 : vector<1x32xf32> to vector<8x32xf32>
    %84 = arith.mulf %82, %83 : vector<8x32xf32>
    %85 = vector.broadcast %64 : vector<1x32xf32> to vector<8x32xf32>
    %86 = arith.addf %84, %85 : vector<8x32xf32>
    %c0_32 = arith.constant 0 : index
    %c0_33 = arith.constant 0 : index
    %87 = vector.load %arg3[%c0_32, %c0_33] : memref<8x1xf32, #tpu.memory_space<vmem>>, vector<8x1xf32>
    %c0_34 = arith.constant 0 : index
    %c0_35 = arith.constant 0 : index
    %c0_36 = arith.constant 0 : index
    %88 = vector.load %arg2[%c0_34, %c0_35, %c0_36] : memref<1x8x32xf32, #tpu.memory_space<vmem>>, vector<1x8x32xf32>
    %89 = vector.shape_cast %88 : vector<1x8x32xf32> to vector<8x32xf32>
    %90 = vector.broadcast %87 : vector<8x1xf32> to vector<8x32xf32>
    %91 = arith.mulf %89, %90 : vector<8x32xf32>
    %92 = arith.truncf %86 : vector<8x32xf32> to vector<8x32xbf16>
    %93 = arith.truncf %91 : vector<8x32xf32> to vector<8x32xbf16>
    %94 = tpu.concatenate %92, %93 in 1 : vector<8x32xbf16>, vector<8x32xbf16> -> vector<8x64xbf16>
    %c0_37 = arith.constant 0 : index
    %c0_38 = arith.constant 0 : index
    %c0_39 = arith.constant 0 : index
    %95 = vector.load %arg9[%c0_37, %c0_38, %c0_39] : memref<1x64x32xbf16, #tpu.memory_space<vmem>>, vector<1x64x32xbf16>
    %96 = vector.shape_cast %95 : vector<1x64x32xbf16> to vector<64x32xbf16>
    %cst_40 = arith.constant dense<0.000000e+00> : vector<8x32xf32>
    %97 = tpu.matmul %94, %96, %cst_40 {dimension_numbers = #tpu.dot_dimension_numbers<[1], [0], [0], [1], [0, 0, 1, 1], [], []>} : vector<8x64xbf16>, vector<64x32xbf16>, vector<8x32xf32> -> vector<8x32xf32>
    %c8 = arith.constant 8 : index
    %c0_41 = arith.constant 0 : index
    %98 = vector.load %arg8[%c8, %c0_41] : memref<12x32xf32, #tpu.memory_space<vmem>>, vector<1x32xf32>
    %99 = vector.broadcast %98 : vector<1x32xf32> to vector<8x32xf32>
    %100 = arith.addf %97, %99 : vector<8x32xf32>
    %101 = arith.negf %100 : vector<8x32xf32>
    %102 = math.exp %101 : vector<8x32xf32>
    %cst_42 = arith.constant 1.000000e+00 : f32
    %103 = vector.broadcast %cst_42 : f32 to vector<8x32xf32>
    %104 = arith.addf %103, %102 : vector<8x32xf32>
    %105 = arith.divf %103, %104 : vector<8x32xf32>
    %c0_43 = arith.constant 0 : index
    %c0_44 = arith.constant 0 : index
    %c0_45 = arith.constant 0 : index
    %106 = vector.load %arg10[%c0_43, %c0_44, %c0_45] : memref<1x64x32xbf16, #tpu.memory_space<vmem>>, vector<1x64x32xbf16>
    %107 = vector.shape_cast %106 : vector<1x64x32xbf16> to vector<64x32xbf16>
    %cst_46 = arith.constant dense<0.000000e+00> : vector<8x32xf32>
    %108 = tpu.matmul %94, %107, %cst_46 {dimension_numbers = #tpu.dot_dimension_numbers<[1], [0], [0], [1], [0, 0, 1, 1], [], []>} : vector<8x64xbf16>, vector<64x32xbf16>, vector<8x32xf32> -> vector<8x32xf32>
    %c9 = arith.constant 9 : index
    %c0_47 = arith.constant 0 : index
    %109 = vector.load %arg8[%c9, %c0_47] : memref<12x32xf32, #tpu.memory_space<vmem>>, vector<1x32xf32>
    %110 = vector.broadcast %109 : vector<1x32xf32> to vector<8x32xf32>
    %111 = arith.addf %108, %110 : vector<8x32xf32>
    %112 = arith.negf %111 : vector<8x32xf32>
    %113 = math.exp %112 : vector<8x32xf32>
    %cst_48 = arith.constant 1.000000e+00 : f32
    %114 = vector.broadcast %cst_48 : f32 to vector<8x32xf32>
    %115 = arith.addf %114, %113 : vector<8x32xf32>
    %116 = arith.divf %114, %115 : vector<8x32xf32>
    %c0_49 = arith.constant 0 : index
    %c0_50 = arith.constant 0 : index
    %c0_51 = arith.constant 0 : index
    %117 = vector.load %arg11[%c0_49, %c0_50, %c0_51] : memref<1x32x32xbf16, #tpu.memory_space<vmem>>, vector<1x32x32xbf16>
    %118 = vector.shape_cast %117 : vector<1x32x32xbf16> to vector<32x32xbf16>
    %cst_52 = arith.constant dense<0.000000e+00> : vector<8x32xf32>
    %119 = tpu.matmul %92, %118, %cst_52 {dimension_numbers = #tpu.dot_dimension_numbers<[1], [0], [0], [1], [0, 0, 1, 1], [], []>} : vector<8x32xbf16>, vector<32x32xbf16>, vector<8x32xf32> -> vector<8x32xf32>
    %c10 = arith.constant 10 : index
    %c0_53 = arith.constant 0 : index
    %120 = vector.load %arg8[%c10, %c0_53] : memref<12x32xf32, #tpu.memory_space<vmem>>, vector<1x32xf32>
    %121 = vector.broadcast %120 : vector<1x32xf32> to vector<8x32xf32>
    %122 = arith.addf %119, %121 : vector<8x32xf32>
    %c0_54 = arith.constant 0 : index
    %c0_55 = arith.constant 0 : index
    %c0_56 = arith.constant 0 : index
    %123 = vector.load %arg12[%c0_54, %c0_55, %c0_56] : memref<1x32x32xbf16, #tpu.memory_space<vmem>>, vector<1x32x32xbf16>
    %124 = vector.shape_cast %123 : vector<1x32x32xbf16> to vector<32x32xbf16>
    %cst_57 = arith.constant dense<0.000000e+00> : vector<8x32xf32>
    %125 = tpu.matmul %93, %124, %cst_57 {dimension_numbers = #tpu.dot_dimension_numbers<[1], [0], [0], [1], [0, 0, 1, 1], [], []>} : vector<8x32xbf16>, vector<32x32xbf16>, vector<8x32xf32> -> vector<8x32xf32>
    %c11 = arith.constant 11 : index
    %c0_58 = arith.constant 0 : index
    %126 = vector.load %arg8[%c11, %c0_58] : memref<12x32xf32, #tpu.memory_space<vmem>>, vector<1x32xf32>
    %127 = vector.broadcast %126 : vector<1x32xf32> to vector<8x32xf32>
    %128 = arith.addf %125, %127 : vector<8x32xf32>
    %129 = arith.mulf %105, %128 : vector<8x32xf32>
    %130 = arith.addf %122, %129 : vector<8x32xf32>
    %131 = math.tanh %130 : vector<8x32xf32>
    %cst_59 = arith.constant 1.000000e+00 : f32
    %132 = vector.broadcast %cst_59 : f32 to vector<8x32xf32>
    %133 = arith.subf %132, %116 : vector<8x32xf32>
    %134 = arith.mulf %133, %131 : vector<8x32xf32>
    %135 = arith.mulf %116, %91 : vector<8x32xf32>
    %136 = arith.addf %134, %135 : vector<8x32xf32>
    %c6 = arith.constant 6 : index
    %c0_60 = arith.constant 0 : index
    %137 = vector.load %arg8[%c6, %c0_60] : memref<12x32xf32, #tpu.memory_space<vmem>>, vector<1x32xf32>
    %c7 = arith.constant 7 : index
    %c0_61 = arith.constant 0 : index
    %138 = vector.load %arg8[%c7, %c0_61] : memref<12x32xf32, #tpu.memory_space<vmem>>, vector<1x32xf32>
    %cst_62 = arith.constant dense<0.000000e+00> : vector<8xf32>
    %139 = vector.multi_reduction <add>, %136, %cst_62 [1] : vector<8x32xf32> to vector<8xf32>
    %140 = vector.shape_cast %139 : vector<8xf32> to vector<8x1xf32>
    %cst_63 = arith.constant 3.200000e+01 : f32
    %141 = vector.broadcast %cst_63 : f32 to vector<8x1xf32>
    %142 = arith.divf %140, %141 : vector<8x1xf32>
    %143 = arith.mulf %136, %136 : vector<8x32xf32>
    %cst_64 = arith.constant dense<0.000000e+00> : vector<8xf32>
    %144 = vector.multi_reduction <add>, %143, %cst_64 [1] : vector<8x32xf32> to vector<8xf32>
    %145 = vector.shape_cast %144 : vector<8xf32> to vector<8x1xf32>
    %cst_65 = arith.constant 3.200000e+01 : f32
    %146 = vector.broadcast %cst_65 : f32 to vector<8x1xf32>
    %147 = arith.divf %145, %146 : vector<8x1xf32>
    %148 = arith.mulf %142, %142 : vector<8x1xf32>
    %149 = arith.subf %147, %148 : vector<8x1xf32>
    %150 = vector.broadcast %142 : vector<8x1xf32> to vector<8x32xf32>
    %151 = arith.subf %136, %150 : vector<8x32xf32>
    %cst_66 = arith.constant 9.99999974E-6 : f32
    %152 = vector.broadcast %cst_66 : f32 to vector<8x1xf32>
    %153 = arith.addf %149, %152 : vector<8x1xf32>
    %154 = math.rsqrt %153 : vector<8x1xf32>
    %155 = vector.broadcast %154 : vector<8x1xf32> to vector<8x32xf32>
    %156 = arith.mulf %151, %155 : vector<8x32xf32>
    %157 = vector.broadcast %137 : vector<1x32xf32> to vector<8x32xf32>
    %158 = arith.mulf %156, %157 : vector<8x32xf32>
    %159 = vector.broadcast %138 : vector<1x32xf32> to vector<8x32xf32>
    %160 = arith.addf %158, %159 : vector<8x32xf32>
    %161 = arith.truncf %160 : vector<8x32xf32> to vector<8x32xbf16>
    %c0_67 = arith.constant 0 : index
    %c0_68 = arith.constant 0 : index
    %162 = vector.load %arg13[%c0_67, %c0_68] : memref<32x128xbf16, #tpu.memory_space<vmem>>, vector<32x128xbf16>
    %cst_69 = arith.constant dense<0.000000e+00> : vector<8x128xf32>
    %163 = tpu.matmul %161, %162, %cst_69 {dimension_numbers = #tpu.dot_dimension_numbers<[1], [0], [0], [1], [0, 0, 1, 1], [], []>} : vector<8x32xbf16>, vector<32x128xbf16>, vector<8x128xf32> -> vector<8x128xf32>
    %c0_70 = arith.constant 0 : index
    %c0_71 = arith.constant 0 : index
    %164 = vector.load %arg14[%c0_70, %c0_71] : memref<1x128xf32, #tpu.memory_space<vmem>>, vector<1x128xf32>
    %165 = vector.broadcast %164 : vector<1x128xf32> to vector<8x128xf32>
    %166 = arith.addf %163, %165 : vector<8x128xf32>
    %c0_72 = arith.constant 0 : index
    %c0_73 = arith.constant 0 : index
    %167 = vector.load %arg4[%c0_72, %c0_73] : memref<8x128xf32, #tpu.memory_space<vmem>>, vector<8x128xf32>
    %cst_74 = arith.constant 0.000000e+00 : f32
    %168 = vector.broadcast %cst_74 : f32 to vector<8x128xf32>
    %169 = arith.cmpf oeq, %167, %168 : vector<8x128xf32>
    %cst_75 = arith.constant -1.000000e+10 : f32
    %170 = vector.broadcast %cst_75 : f32 to vector<8x128xf32>
    %171 = arith.select %169, %170, %166 : vector<8x128xi1>, vector<8x128xf32>
    %172 = tpu.iota {dimensions = array<i32: 1>} : vector<8x128xi32>
    %cst_76 = arith.constant dense<0xFF800000> : vector<8xf32>
    %173 = vector.multi_reduction <maximumf>, %171, %cst_76 [1] : vector<8x128xf32> to vector<8xf32>
    %174 = vector.shape_cast %173 : vector<8xf32> to vector<8x1xf32>
    %175 = vector.broadcast %174 : vector<8x1xf32> to vector<8x128xf32>
    %176 = arith.cmpf oge, %171, %175 : vector<8x128xf32>
    %c128_i32 = arith.constant 128 : i32
    %177 = vector.broadcast %c128_i32 : i32 to vector<8x128xi32>
    %178 = arith.select %176, %172, %177 : vector<8x128xi1>, vector<8x128xi32>
    %cst_77 = arith.constant dense<2147483647> : vector<8xi32>
    %179 = vector.multi_reduction <minsi>, %178, %cst_77 [1] : vector<8x128xi32> to vector<8xi32>
    %180 = vector.shape_cast %179 : vector<8xi32> to vector<8x1xi32>
    %181 = vector.broadcast %174 : vector<8x1xf32> to vector<8x128xf32>
    %182 = arith.subf %171, %181 : vector<8x128xf32>
    %183 = math.exp %182 : vector<8x128xf32>
    %cst_78 = arith.constant dense<0.000000e+00> : vector<8xf32>
    %184 = vector.multi_reduction <add>, %183, %cst_78 [1] : vector<8x128xf32> to vector<8xf32>
    %185 = vector.shape_cast %184 : vector<8xf32> to vector<8x1xf32>
    %186 = math.log %185 : vector<8x1xf32>
    %187 = vector.broadcast %180 : vector<8x1xi32> to vector<8x128xi32>
    %188 = arith.cmpi eq, %172, %187 : vector<8x128xi32>
    %189 = vector.broadcast %186 : vector<8x1xf32> to vector<8x128xf32>
    %190 = arith.subf %182, %189 : vector<8x128xf32>
    %cst_79 = arith.constant 0.000000e+00 : f32
    %191 = vector.broadcast %cst_79 : f32 to vector<8x128xf32>
    %192 = arith.select %188, %190, %191 : vector<8x128xi1>, vector<8x128xf32>
    %cst_80 = arith.constant dense<0.000000e+00> : vector<8xf32>
    %193 = vector.multi_reduction <add>, %192, %cst_80 [1] : vector<8x128xf32> to vector<8xf32>
    %194 = vector.shape_cast %193 : vector<8xf32> to vector<8x1xf32>
    %195 = arith.sitofp %180 : vector<8x1xi32> to vector<8x1xf32>
    %cst_81 = arith.constant 0.000000e+00 : f32
    %196 = vector.broadcast %cst_81 : f32 to vector<8x94xf32>
    %197 = tpu.concatenate %195, %194, %136, %196 in 1 : vector<8x1xf32>, vector<8x1xf32>, vector<8x32xf32>, vector<8x94xf32> -> vector<8x128xf32>
    %c0_82 = arith.constant 0 : index
    %c0_83 = arith.constant 0 : index
    %198 = vector.load %arg15[%c0_82, %c0_83] : memref<8x128xf32, #tpu.memory_space<vmem>>, vector<8x128xf32>
    tpu.vector_store %arg15[%c0_82, %c0_83], %197 {strides = array<i32>} : memref<8x128xf32, #tpu.memory_space<vmem>>, vector<8x128xf32>,
    return
  }
  func.func @transform_0(%arg0: i32) -> (i32, i32) {
    %c0_i32 = arith.constant 0 : i32
    %c0_i32_0 = arith.constant 0 : i32
    return %arg0, %c0_i32 : i32, i32
  }
  func.func @transform_1(%arg0: i32) -> (i32, i32, i32) {
    %c0_i32 = arith.constant 0 : i32
    %c0_i32_0 = arith.constant 0 : i32
    %c0_i32_1 = arith.constant 0 : i32
    return %c0_i32, %arg0, %c0_i32_0 : i32, i32, i32
  }
  func.func @transform_2(%arg0: i32) -> (i32, i32) {
    %c0_i32 = arith.constant 0 : i32
    %c0_i32_0 = arith.constant 0 : i32
    return %arg0, %c0_i32 : i32, i32
  }
  func.func @transform_3(%arg0: i32) -> (i32, i32) {
    %c0_i32 = arith.constant 0 : i32
    %c0_i32_0 = arith.constant 0 : i32
    return %arg0, %c0_i32 : i32, i32
  }
  func.func @transform_4(%arg0: i32) -> (i32, i32) {
    %c0_i32 = arith.constant 0 : i32
    %c0_i32_0 = arith.constant 0 : i32
    %c0_i32_1 = arith.constant 0 : i32
    return %c0_i32, %c0_i32_0 : i32, i32
  }
  func.func @transform_5(%arg0: i32) -> (i32, i32) {
    %c0_i32 = arith.constant 0 : i32
    %c0_i32_0 = arith.constant 0 : i32
    %c0_i32_1 = arith.constant 0 : i32
    return %c0_i32, %c0_i32_0 : i32, i32
  }
  func.func @transform_6(%arg0: i32) -> (i32, i32) {
    %c0_i32 = arith.constant 0 : i32
    %c0_i32_0 = arith.constant 0 : i32
    %c0_i32_1 = arith.constant 0 : i32
    return %c0_i32, %c0_i32_0 : i32, i32
  }
  func.func @transform_7(%arg0: i32) -> (i32, i32) {
    %c0_i32 = arith.constant 0 : i32
    %c0_i32_0 = arith.constant 0 : i32
    %c0_i32_1 = arith.constant 0 : i32
    return %c0_i32, %c0_i32_0 : i32, i32
  }
  func.func @transform_8(%arg0: i32) -> (i32, i32, i32) {
    %c0_i32 = arith.constant 0 : i32
    %c0_i32_0 = arith.constant 0 : i32
    %c0_i32_1 = arith.constant 0 : i32
    %c0_i32_2 = arith.constant 0 : i32
    return %c0_i32, %c0_i32_0, %c0_i32_1 : i32, i32, i32
  }
  func.func @transform_9(%arg0: i32) -> (i32, i32, i32) {
    %c0_i32 = arith.constant 0 : i32
    %c0_i32_0 = arith.constant 0 : i32
    %c0_i32_1 = arith.constant 0 : i32
    %c0_i32_2 = arith.constant 0 : i32
    return %c0_i32, %c0_i32_0, %c0_i32_1 : i32, i32, i32
  }
  func.func @transform_10(%arg0: i32) -> (i32, i32, i32) {
    %c0_i32 = arith.constant 0 : i32
    %c0_i32_0 = arith.constant 0 : i32
    %c0_i32_1 = arith.constant 0 : i32
    %c0_i32_2 = arith.constant 0 : i32
    return %c0_i32, %c0_i32_0, %c0_i32_1 : i32, i32, i32
  }
  func.func @transform_11(%arg0: i32) -> (i32, i32, i32) {
    %c0_i32 = arith.constant 0 : i32
    %c0_i32_0 = arith.constant 0 : i32
    %c0_i32_1 = arith.constant 0 : i32
    %c0_i32_2 = arith.constant 0 : i32
    return %c0_i32, %c0_i32_0, %c0_i32_1 : i32, i32, i32
  }
  func.func @transform_12(%arg0: i32) -> (i32, i32) {
    %c0_i32 = arith.constant 0 : i32
    %c0_i32_0 = arith.constant 0 : i32
    %c0_i32_1 = arith.constant 0 : i32
    return %c0_i32, %c0_i32_0 : i32, i32
  }
  func.func @transform_13(%arg0: i32) -> (i32, i32) {
    %c0_i32 = arith.constant 0 : i32
    %c0_i32_0 = arith.constant 0 : i32
    %c0_i32_1 = arith.constant 0 : i32
    return %c0_i32, %c0_i32_0 : i32, i32
  }
  func.func @transform_14(%arg0: i32) -> (i32, i32) {
    %c0_i32 = arith.constant 0 : i32
    %c0_i32_0 = arith.constant 0 : i32
    return %arg0, %c0_i32 : i32, i32
  }
}

</mosaic_0001>

<llo_original>
// kernel: tpu_custom_call.1
$region0: #{tpu_custom_call.1}
  #allocation0 [shape = 'u32[]', space=smem, size = 0x4, offset = 0x4, fixed_abs, tag = 'smem constant byte address 0x4 - core index']
  #allocation1 [shape = 'u32[144,128]{1,0:T(1,128)}', space=vmem, size = 0x12000, scoped, tag = 'internal scratch']
  %s0 = inlined_call_operand.hbm [shape: f32[8,32], index: 0, kind: input, shape index: {}]
  %s1 = inlined_call_operand.hbm [shape: f32[1,8,32], index: 1, kind: input, shape index: {}]
  %s2 = inlined_call_operand.vmem [shape: f32[8,1], index: 2, kind: input, shape index: {}]
  %s3 = inlined_call_operand.hbm [shape: f32[8,128], index: 3, kind: input, shape index: {}]
  %s4 = inlined_call_operand.vmem [shape: f32[2,32], index: 4, kind: input, shape index: {}]
  %s5 = inlined_call_operand.vmem [shape: bf16[32,32], index: 5, kind: input, shape index: {}]
  %s6 = inlined_call_operand.vmem [shape: bf16[32,32], index: 6, kind: input, shape index: {}]
  %s7 = inlined_call_operand.vmem [shape: f32[12,32], index: 7, kind: input, shape index: {}]
  %s8 = inlined_call_operand.vmem [shape: bf16[1,64,32], index: 8, kind: input, shape index: {}]
  %s9 = inlined_call_operand.vmem [shape: bf16[1,64,32], index: 9, kind: input, shape index: {}]
  %s10 = inlined_call_operand.vmem [shape: bf16[1,32,32], index: 10, kind: input, shape index: {}]
  %s11 = inlined_call_operand.vmem [shape: bf16[1,32,32], index: 11, kind: input, shape index: {}]
  %s12 = inlined_call_operand.vmem [shape: bf16[32,128], index: 12, kind: input, shape index: {}]
  %s13 = inlined_call_operand.vmem [shape: f32[1,128], index: 13, kind: input, shape index: {}]
  %s14 = inlined_call_operand.hbm [shape: f32[8,128], index: 14, kind: output, shape index: {}]
  %s15 = sld [smem:[#allocation0]]
  $region78: #{tpu_custom_call.1} parent=0
    _
  %s17 = ssub.s32 1, %s15
  %s18 = scalar_select 0, %s17, %s15
  $region1: #{tpu_custom_call.1} parent=0
    #allocation2 [shape = 'u8[4096]{0}', space=vmem, size = 0x1000, scoped, tag = 'input window, operand 0, single buffered']
    #allocation3 [shape = 's32[1]{0}', space=sflag, size = 0x4, scoped, tag = 'scoped memory for tpu_custom_call.1']
    #allocation4 [shape = 's32[1]{0}', space=sflag, size = 0x4, scoped, tag = 'scoped memory for tpu_custom_call.1']
    #allocation5 [shape = 'u8[4096]{0}', space=vmem, size = 0x1000, scoped, tag = 'input window, operand 1, single buffered']
    #allocation6 [shape = 's32[1]{0}', space=sflag, size = 0x4, scoped, tag = 'scoped memory for tpu_custom_call.1']
    #allocation7 [shape = 'u8[4096]{0}', space=vmem, size = 0x1000, scoped, tag = 'input window, operand 3, single buffered']
    #allocation8 [shape = 'u8[4096]{0}', space=vmem, size = 0x1000, scoped, tag = 'output window, operand 0, single buffered']
    %19 = vsyncpa [#allocation3], 0
    %20 = vsyncpa [#allocation6], 0
    %21 = vsyncpa [#allocation4], 0
    // Predicated region
    $region2: #{tpu_custom_call.1} parent=1 // pred_check
      _
    $region3: #{tpu_custom_call.1} parent=1 // pred_check_branch
      %23 = sbr.rel (0) target = $region5
    $region4: #{tpu_custom_call.1} parent=1 // pred_region
      %s25 = ssub.s32 128, 128
      %26 = vsyncadd [#allocation3], %s25
      %s28 = sshll.u32 [#allocation2], 4
      %s29 = int_to_ptr.vmem [resolvable:$true] %s28
      %31 = dma.hbm_to_vmem [thread:$0]  %s0, 128, %s29, [#allocation3]
    $region5: #{tpu_custom_call.1} parent=1 // pred_fallthru
      _
    // Predicated region
    $region6: #{tpu_custom_call.1} parent=1 // pred_check
      _
    $region7: #{tpu_custom_call.1} parent=1 // pred_check_branch
      %33 = sbr.rel (0) target = $region9
    $region8: #{tpu_custom_call.1} parent=1 // pred_region
      %s35 = ssub.s32 128, 128
      %36 = vsyncadd [#allocation6], %s35
      %s38 = sshll.u32 [#allocation5], 4
      %s39 = int_to_ptr.vmem [resolvable:$true] %s38
      %41 = dma.hbm_to_vmem [thread:$0]  %s1, 128, %s39, [#allocation6]
    $region9: #{tpu_custom_call.1} parent=1 // pred_fallthru
      _
    // Predicated region
    $region10: #{tpu_custom_call.1} parent=1 // pred_check
      _
    $region11: #{tpu_custom_call.1} parent=1 // pred_check_branch
      %43 = sbr.rel (0) target = $region13
    $region12: #{tpu_custom_call.1} parent=1 // pred_region
      _
    $region13: #{tpu_custom_call.1} parent=1 // pred_fallthru
      _
    // Predicated region
    $region14: #{tpu_custom_call.1} parent=1 // pred_check
      _
    $region15: #{tpu_custom_call.1} parent=1 // pred_check_branch
      %45 = sbr.rel (0) target = $region17
    $region16: #{tpu_custom_call.1} parent=1 // pred_region
      %s47 = ssub.s32 128, 128
      %48 = vsyncadd [#allocation6], %s47
      %s50 = sshll.u32 [#allocation7], 4
      %s51 = int_to_ptr.vmem [resolvable:$true] %s50
      %53 = dma.hbm_to_vmem [thread:$0]  %s3, 128, %s51, [#allocation6]
    $region17: #{tpu_custom_call.1} parent=1 // pred_fallthru
      _
    // Predicated region
    $region18: #{tpu_custom_call.1} parent=1 // pred_check
      _
    $region19: #{tpu_custom_call.1} parent=1 // pred_check_branch
      %55 = sbr.rel (0) target = $region21
    $region20: #{tpu_custom_call.1} parent=1 // pred_region
      _
    $region21: #{tpu_custom_call.1} parent=1 // pred_fallthru
      _
    // Predicated region
    $region22: #{tpu_custom_call.1} parent=1 // pred_check
      _
    $region23: #{tpu_custom_call.1} parent=1 // pred_check_branch
      %57 = sbr.rel (0) target = $region25
    $region24: #{tpu_custom_call.1} parent=1 // pred_region
      _
    $region25: #{tpu_custom_call.1} parent=1 // pred_fallthru
      _
    // Predicated region
    $region26: #{tpu_custom_call.1} parent=1 // pred_check
      _
    $region27: #{tpu_custom_call.1} parent=1 // pred_check_branch
      %59 = sbr.rel (0) target = $region29
    $region28: #{tpu_custom_call.1} parent=1 // pred_region
      _
    $region29: #{tpu_custom_call.1} parent=1 // pred_fallthru
      _
    // Predicated region
    $region30: #{tpu_custom_call.1} parent=1 // pred_check
      _
    $region31: #{tpu_custom_call.1} parent=1 // pred_check_branch
      %61 = sbr.rel (0) target = $region33
    $region32: #{tpu_custom_call.1} parent=1 // pred_region
      _
    $region33: #{tpu_custom_call.1} parent=1 // pred_fallthru
      _
    // Predicated region
    $region34: #{tpu_custom_call.1} parent=1 // pred_check
      _
    $region35: #{tpu_custom_call.1} parent=1 // pred_check_branch
      %63 = sbr.rel (0) target = $region37
    $region36: #{tpu_custom_call.1} parent=1 // pred_region
      _
    $region37: #{tpu_custom_call.1} parent=1 // pred_fallthru
      _
    // Predicated region
    $region38: #{tpu_custom_call.1} parent=1 // pred_check
      _
    $region39: #{tpu_custom_call.1} parent=1 // pred_check_branch
      %65 = sbr.rel (0) target = $region41
    $region40: #{tpu_custom_call.1} parent=1 // pred_region
      _
    $region41: #{tpu_custom_call.1} parent=1 // pred_fallthru
      _
    // Predicated region
    $region42: #{tpu_custom_call.1} parent=1 // pred_check
      _
    $region43: #{tpu_custom_call.1} parent=1 // pred_check_branch
      %67 = sbr.rel (0) target = $region45
    $region44: #{tpu_custom_call.1} parent=1 // pred_region
      _
    $region45: #{tpu_custom_call.1} parent=1 // pred_fallthru
      _
    // Predicated region
    $region46: #{tpu_custom_call.1} parent=1 // pred_check
      _
    $region47: #{tpu_custom_call.1} parent=1 // pred_check_branch
      %69 = sbr.rel (0) target = $region49
    $region48: #{tpu_custom_call.1} parent=1 // pred_region
      _
    $region49: #{tpu_custom_call.1} parent=1 // pred_fallthru
      _
    // Predicated region
    $region50: #{tpu_custom_call.1} parent=1 // pred_check
      _
    $region51: #{tpu_custom_call.1} parent=1 // pred_check_branch
      %71 = sbr.rel (0) target = $region53
    $region52: #{tpu_custom_call.1} parent=1 // pred_region
      _
    $region53: #{tpu_custom_call.1} parent=1 // pred_fallthru
      _
    // Predicated region
    $region54: #{tpu_custom_call.1} parent=1 // pred_check
      _
    $region55: #{tpu_custom_call.1} parent=1 // pred_check_branch
      %73 = sbr.rel (0) target = $region57
    $region56: #{tpu_custom_call.1} parent=1 // pred_region
      _
    $region57: #{tpu_custom_call.1} parent=1 // pred_fallthru
      _
    // Predicated region
    $region58: #{tpu_custom_call.1} parent=1 // pred_check
      _
    $region59: #{tpu_custom_call.1} parent=1 // pred_check_branch
      %75 = sbr.rel (0) target = $region61
    $region60: #{tpu_custom_call.1} parent=1 // pred_region
      %76 = dma.done [#allocation3], 128
    $region61: #{tpu_custom_call.1} parent=1 // pred_fallthru
      _
    // Predicated region
    $region62: #{tpu_custom_call.1} parent=1 // pred_check
      _
    $region63: #{tpu_custom_call.1} parent=1 // pred_check_branch
      %78 = sbr.rel (0) target = $region65
    $region64: #{tpu_custom_call.1} parent=1 // pred_region
      %79 = dma.done [#allocation6], 128
    $region65: #{tpu_custom_call.1} parent=1 // pred_fallthru
      _
    // Predicated region
    $region66: #{tpu_custom_call.1} parent=1 // pred_check
      _
    $region67: #{tpu_custom_call.1} parent=1 // pred_check_branch
      %81 = sbr.rel (0) target = $region69
    $region68: #{tpu_custom_call.1} parent=1 // pred_region
      %82 = dma.done [#allocation6], 128
    $region69: #{tpu_custom_call.1} parent=1 // pred_fallthru
      _
    %v84 = vld [vmem:[#allocation2] sm:$0xff]
    %v85 = vld [vmem:[%s4] sm:$0x1]
    %v86 = vld [vmem:[%s4 + $0x1] sm:$0x1]
    %vm87 = vcmask 261120
    %v88 = vsel %vm87, %v84, 0.0
    %89 = vadd.xlane.f32.xlu0 %v88
    %v90 = vpop.xlane.xlu0 %89
    %v91 = vrcp.pop 32.0
    %v92 = vmul.f32 %v90, %v91
    %v93 = vmul.f32 %v84, %v84
    %v94 = vsel %vm87, %v93, 0.0
    %95 = vadd.xlane.f32.xlu0 %v94
    %v96 = vpop.xlane.xlu0 %95
    %v97 = vmul.f32 %v96, %v91
    %v98 = vmul.f32 %v92, %v92
    %v99 = vsub.f32 %v97, %v98
    %v100 = vsub.f32 %v84, %v92
    %v101 = vadd.f32 %v99, 1e-05
    %v102 = vrsqrt.pop %v101
    %v103 = vmul.f32 %v100, %v102
    %v104 = vlaneseq
    %v105 = vshrl.u32 %v104, 7
    %v106 = vsub.s32 0, %v105
    %v107 = vrot.slane %v85, %v106
    %v108 = vmul.f32 %v103, %v107
    %v109 = vlaneseq
    %v110 = vshrl.u32 %v109, 7
    %v111 = vsub.s32 0, %v110
    %v112 = vrot.slane %v86, %v111
    %v113 = vadd.f32 %v108, %v112
    %v114 = vpack.c.bf16 %v113, %v113
    %v115 = vld [vmem:[%s5] sm:$0xf]
    %v116 = vld [vmem:[%s5 + $0x4] sm:$0xf]
    %v117 = vld [vmem:[%s5 + $0x8] sm:$0xf]
    %v118 = vld [vmem:[%s5 + $0xc] sm:$0xf]
    %v119 = vld [vmem:[%s7] sm:$0x1]
    %v120 = vlaneseq
    %v121 = vshrl.u32 %v120, 7
    %v122 = vsub.s32 0, %v121
    %v123 = vrot.slane %v119, %v122
    %v128 = vunpack.c.l.b16 %v115
    %v129 = vunpack.c.l.b16 %v116
    %v130 = vunpack.c.l.b16 %v117
    %v131 = vunpack.c.l.b16 %v118
    %v132 = vpack.c.b16 %v129, %v128
    %v133 = vpack.c.b16 %v131, %v130
    %v137 = vsel %vm87, %v114, 0
    %139 = vmatprep.subr.bf16.mxu0 0
    %140 = vmatpush1.bf16.msra.mxu0 %v132
    %141 = vmatprep.subr.bf16.mxu0 0
    %142 = vmatpush1.bf16.msra.mxu0 %v133
    %143 = vmatprep.subr.bf16.mxu0 0
    %144 = vmatpush1.bf16.msra.mxu0 0
    %145 = vmatprep.subr.bf16.mxu0 0
    %146 = vmatpush1.bf16.msra.mxu0 0
    %147 = vmatprep.subr.bf16.mxu0 0
    %148 = vmatpush1.bf16.msra.mxu0 0
    %149 = vmatprep.subr.bf16.mxu0 0
    %150 = vmatpush1.bf16.msra.mxu0 0
    %151 = vmatprep.subr.bf16.mxu0 0
    %152 = vmatpush1.bf16.msra.mxu0 0
    %153 = vmatprep.subr.bf16.mxu0 0
    %154 = vmatpush1.bf16.msra.mxu0 0
    %155 = vmatprep.subr.bf16.mxu0 0
    %156 = vmatpush1.bf16.msra.mxu0 0
    %157 = vmatprep.subr.bf16.mxu0 0
    %158 = vmatpush1.bf16.msra.mxu0 0
    %159 = vmatprep.subr.bf16.mxu0 0
    %160 = vmatpush1.bf16.msra.mxu0 0
    %161 = vmatprep.subr.bf16.mxu0 0
    %162 = vmatpush1.bf16.msra.mxu0 0
    %163 = vmatprep.subr.bf16.mxu0 0
    %164 = vmatpush1.bf16.msra.mxu0 0
    %165 = vmatprep.subr.bf16.mxu0 0
    %166 = vmatpush1.bf16.msra.mxu0 0
    %167 = vmatprep.subr.bf16.mxu0 0
    %168 = vmatpush1.bf16.msra.mxu0 0
    %169 = vmatprep.subr.bf16.mxu0 0
    %170 = vmatpush1.bf16.msra.mxu0 0
    %171 = vmatprep.mubr.bf16.mxu0 0
    %172 = vmatmul.mubr.bf16.gmra.mrb[0].mxu0 %v137
    %v173 = vpop.f32.mrb[0].mxu0
    %v174 = vadd.f32 %v123, %v173
    %v175 = vpop.f32.mrb[0].mxu0
    %v176 = vpop.f32.mrb[0].mxu0
    %v177 = vpop.f32.mrb[0].mxu0
    %178 = vdwg.mxu0
    %v179 = vtanh.pop %v174
    %v180 = vld [vmem:[%s7 + $0x1] sm:$0x1]
    %v181 = vld [vmem:[%s7 + $0x2] sm:$0x1]
    %v182 = vsel %vm87, %v179, 0.0
    %183 = vadd.xlane.f32.xlu0 %v182
    %v184 = vpop.xlane.xlu0 %183
    %v185 = vmul.f32 %v184, %v91
    %v186 = vmul.f32 %v179, %v179
    %v187 = vsel %vm87, %v186, 0.0
    %188 = vadd.xlane.f32.xlu0 %v187
    %v189 = vpop.xlane.xlu0 %188
    %v190 = vmul.f32 %v189, %v91
    %v191 = vmul.f32 %v185, %v185
    %v192 = vsub.f32 %v190, %v191
    %v193 = vsub.f32 %v179, %v185
    %v194 = vadd.f32 %v192, 1e-05
    %v195 = vrsqrt.pop %v194
    %v196 = vmul.f32 %v193, %v195
    %v197 = vlaneseq
    %v198 = vshrl.u32 %v197, 7
    %v199 = vsub.s32 0, %v198
    %v200 = vrot.slane %v180, %v199
    %v201 = vmul.f32 %v196, %v200
    %v202 = vlaneseq
    %v203 = vshrl.u32 %v202, 7
    %v204 = vsub.s32 0, %v203
    %v205 = vrot.slane %v181, %v204
    %v206 = vadd.f32 %v201, %v205
    %v207 = vpack.c.bf16 %v206, %v206
    %v208 = vld [vmem:[%s6] sm:$0xf]
    %v209 = vld [vmem:[%s6 + $0x4] sm:$0xf]
    %v210 = vld [vmem:[%s6 + $0x8] sm:$0xf]
    %v211 = vld [vmem:[%s6 + $0xc] sm:$0xf]
    %v212 = vld [vmem:[%s7 + $0x3] sm:$0x1]
    %v213 = vlaneseq
    %v214 = vshrl.u32 %v213, 7
    %v215 = vsub.s32 0, %v214
    %v216 = vrot.slane %v212, %v215
    %v221 = vunpack.c.l.b16 %v208
    %v222 = vunpack.c.l.b16 %v209
    %v223 = vunpack.c.l.b16 %v210
    %v224 = vunpack.c.l.b16 %v211
    %v225 = vpack.c.b16 %v222, %v221
    %v226 = vpack.c.b16 %v224, %v223
    %v230 = vsel %vm87, %v207, 0
    %232 = vmatprep.subr.bf16.mxu0 0
    %233 = vmatpush1.bf16.msra.mxu0 %v225
    %234 = vmatprep.subr.bf16.mxu0 0
    %235 = vmatpush1.bf16.msra.mxu0 %v226
    %236 = vmatprep.subr.bf16.mxu0 0
    %237 = vmatpush1.bf16.msra.mxu0 0
    %238 = vmatprep.subr.bf16.mxu0 0
    %239 = vmatpush1.bf16.msra.mxu0 0
    %240 = vmatprep.subr.bf16.mxu0 0
    %241 = vmatpush1.bf16.msra.mxu0 0
    %242 = vmatprep.subr.bf16.mxu0 0
    %243 = vmatpush1.bf16.msra.mxu0 0
    %244 = vmatprep.subr.bf16.mxu0 0
    %245 = vmatpush1.bf16.msra.mxu0 0
    %246 = vmatprep.subr.bf16.mxu0 0
    %247 = vmatpush1.bf16.msra.mxu0 0
    %248 = vmatprep.subr.bf16.mxu0 0
    %249 = vmatpush1.bf16.msra.mxu0 0
    %250 = vmatprep.subr.bf16.mxu0 0
    %251 = vmatpush1.bf16.msra.mxu0 0
    %252 = vmatprep.subr.bf16.mxu0 0
    %253 = vmatpush1.bf16.msra.mxu0 0
    %254 = vmatprep.subr.bf16.mxu0 0
    %255 = vmatpush1.bf16.msra.mxu0 0
    %256 = vmatprep.subr.bf16.mxu0 0
    %257 = vmatpush1.bf16.msra.mxu0 0
    %258 = vmatprep.subr.bf16.mxu0 0
    %259 = vmatpush1.bf16.msra.mxu0 0
    %260 = vmatprep.subr.bf16.mxu0 0
    %261 = vmatpush1.bf16.msra.mxu0 0
    %262 = vmatprep.subr.bf16.mxu0 0
    %263 = vmatpush1.bf16.msra.mxu0 0
    %264 = vmatprep.mubr.bf16.mxu0 0
    %265 = vmatmul.mubr.bf16.gmra.mrb[0].mxu0 %v230
    %v266 = vpop.f32.mrb[0].mxu0
    %v267 = vadd.f32 %v216, %v266
    %v268 = vpop.f32.mrb[0].mxu0
    %v269 = vpop.f32.mrb[0].mxu0
    %v270 = vpop.f32.mrb[0].mxu0
    %271 = vdwg.mxu0
    %v272 = vtanh.pop %v267
    %v273 = vld [vmem:[%s7 + $0x4] sm:$0x1]
    %v274 = vld [vmem:[%s7 + $0x5] sm:$0x1]
    %v275 = vsel %vm87, %v272, 0.0
    %276 = vadd.xlane.f32.xlu0 %v275
    %v277 = vpop.xlane.xlu0 %276
    %v278 = vmul.f32 %v277, %v91
    %v279 = vmul.f32 %v272, %v272
    %v280 = vsel %vm87, %v279, 0.0
    %281 = vadd.xlane.f32.xlu0 %v280
    %v282 = vpop.xlane.xlu0 %281
    %v283 = vmul.f32 %v282, %v91
    %v284 = vmul.f32 %v278, %v278
    %v285 = vsub.f32 %v283, %v284
    %v286 = vsub.f32 %v272, %v278
    %v287 = vadd.f32 %v285, 1e-05
    %v288 = vrsqrt.pop %v287
    %v289 = vmul.f32 %v286, %v288
    %v290 = vlaneseq
    %v291 = vshrl.u32 %v290, 7
    %v292 = vsub.s32 0, %v291
    %v293 = vrot.slane %v273, %v292
    %v294 = vmul.f32 %v289, %v293
    %v295 = vlaneseq
    %v296 = vshrl.u32 %v295, 7
    %v297 = vsub.s32 0, %v296
    %v298 = vrot.slane %v274, %v297
    %v299 = vadd.f32 %v294, %v298
    %v300 = vld [vmem:[%s2] sm:$0xff]
    %v301 = vld [vmem:[#allocation5] sm:$0xff]
    %303 = vset.pattern.permute.xlu0 0
    %304 = vperm.xlu0 %303, %v300
    %v305 = vpop.permute.xlu0 %304
    %v307 = vmul.f32 %v301, %v305
    %v308 = vpack.c.bf16 %v299, %v299
    %v309 = vpack.c.bf16 %v307, %v307
    %311 = vrot.lane.b32.xlu0 %v309, 32
    %v312 = vpop.permute.xlu0 %311
    %v315 = vsel %vm87, %v308, %v312
    %v316 = vld [vmem:[%s8] sm:$0xf]
    %v317 = vld [vmem:[%s8 + $0x4] sm:$0xf]
    %v318 = vld [vmem:[%s8 + $0x8] sm:$0xf]
    %v319 = vld [vmem:[%s8 + $0xc] sm:$0xf]
    %v320 = vld [vmem:[%s8 + $0x10] sm:$0xf]
    %v321 = vld [vmem:[%s8 + $0x14] sm:$0xf]
    %v322 = vld [vmem:[%s8 + $0x18] sm:$0xf]
    %v323 = vld [vmem:[%s8 + $0x1c] sm:$0xf]
    %v324 = vld [vmem:[%s7 + $0x8] sm:$0x1]
    %v325 = vlaneseq
    %v326 = vshrl.u32 %v325, 7
    %v327 = vsub.s32 0, %v326
    %v328 = vrot.slane %v324, %v327
    %v337 = vunpack.c.l.b16 %v316
    %v338 = vunpack.c.l.b16 %v317
    %v339 = vunpack.c.l.b16 %v318
    %v340 = vunpack.c.l.b16 %v319
    %v341 = vunpack.c.l.b16 %v320
    %v342 = vunpack.c.l.b16 %v321
    %v343 = vunpack.c.l.b16 %v322
    %v344 = vunpack.c.l.b16 %v323
    %v345 = vpack.c.b16 %v338, %v337
    %v346 = vpack.c.b16 %v340, %v339
    %v347 = vpack.c.b16 %v342, %v341
    %v348 = vpack.c.b16 %v344, %v343
    %vm353 = vcmask 523264
    %v354 = vsel %vm353, %v315, 0
    %356 = vmatprep.subr.bf16.mxu0 0
    %357 = vmatpush1.bf16.msra.mxu0 %v345
    %358 = vmatprep.subr.bf16.mxu0 0
    %359 = vmatpush1.bf16.msra.mxu0 %v346
    %360 = vmatprep.subr.bf16.mxu0 0
    %361 = vmatpush1.bf16.msra.mxu0 %v347
    %362 = vmatprep.subr.bf16.mxu0 0
    %363 = vmatpush1.bf16.msra.mxu0 %v348
    %364 = vmatprep.subr.bf16.mxu0 0
    %365 = vmatpush1.bf16.msra.mxu0 0
    %366 = vmatprep.subr.bf16.mxu0 0
    %367 = vmatpush1.bf16.msra.mxu0 0
    %368 = vmatprep.subr.bf16.mxu0 0
    %369 = vmatpush1.bf16.msra.mxu0 0
    %370 = vmatprep.subr.bf16.mxu0 0
    %371 = vmatpush1.bf16.msra.mxu0 0
    %372 = vmatprep.subr.bf16.mxu0 0
    %373 = vmatpush1.bf16.msra.mxu0 0
    %374 = vmatprep.subr.bf16.mxu0 0
    %375 = vmatpush1.bf16.msra.mxu0 0
    %376 = vmatprep.subr.bf16.mxu0 0
    %377 = vmatpush1.bf16.msra.mxu0 0
    %378 = vmatprep.subr.bf16.mxu0 0
    %379 = vmatpush1.bf16.msra.mxu0 0
    %380 = vmatprep.subr.bf16.mxu0 0
    %381 = vmatpush1.bf16.msra.mxu0 0
    %382 = vmatprep.subr.bf16.mxu0 0
    %383 = vmatpush1.bf16.msra.mxu0 0
    %384 = vmatprep.subr.bf16.mxu0 0
    %385 = vmatpush1.bf16.msra.mxu0 0
    %386 = vmatprep.subr.bf16.mxu0 0
    %387 = vmatpush1.bf16.msra.mxu0 0
    %388 = vmatprep.mubr.bf16.mxu0 0
    %389 = vmatmul.mubr.bf16.gmra.mrb[0].mxu0 %v354
    %v390 = vpop.f32.mrb[0].mxu0
    %v391 = vadd.f32 %v328, %v390
    %v392 = vpop.f32.mrb[0].mxu0
    %v393 = vpop.f32.mrb[0].mxu0
    %v394 = vpop.f32.mrb[0].mxu0
    %395 = vdwg.mxu0
    %v396 = vxor.u32 %v391, 2147483648
    %v397 = vmul.f32 %v396, 1.442695
    %v398 = vpow.pop %v397
    %v399 = vadd.f32 %v398, 1.0
    %v400 = vrcp.pop %v399
    %v401 = vmul.f32 1.0, %v400
    %v402 = vld [vmem:[%s9] sm:$0xf]
    %v403 = vld [vmem:[%s9 + $0x4] sm:$0xf]
    %v404 = vld [vmem:[%s9 + $0x8] sm:$0xf]
    %v405 = vld [vmem:[%s9 + $0xc] sm:$0xf]
    %v406 = vld [vmem:[%s9 + $0x10] sm:$0xf]
    %v407 = vld [vmem:[%s9 + $0x14] sm:$0xf]
    %v408 = vld [vmem:[%s9 + $0x18] sm:$0xf]
    %v409 = vld [vmem:[%s9 + $0x1c] sm:$0xf]
    %v410 = vld [vmem:[%s7 + $0x9] sm:$0x1]
    %v411 = vlaneseq
    %v412 = vshrl.u32 %v411, 7
    %v413 = vsub.s32 0, %v412
    %v414 = vrot.slane %v410, %v413
    %v423 = vunpack.c.l.b16 %v402
    %v424 = vunpack.c.l.b16 %v403
    %v425 = vunpack.c.l.b16 %v404
    %v426 = vunpack.c.l.b16 %v405
    %v427 = vunpack.c.l.b16 %v406
    %v428 = vunpack.c.l.b16 %v407
    %v429 = vunpack.c.l.b16 %v408
    %v430 = vunpack.c.l.b16 %v409
    %v431 = vpack.c.b16 %v424, %v423
    %v432 = vpack.c.b16 %v426, %v425
    %v433 = vpack.c.b16 %v428, %v427
    %v434 = vpack.c.b16 %v430, %v429
    %439 = vmatprep.subr.bf16.mxu0 0
    %440 = vmatpush1.bf16.msra.mxu0 %v431
    %441 = vmatprep.subr.bf16.mxu0 0
    %442 = vmatpush1.bf16.msra.mxu0 %v432
    %443 = vmatprep.subr.bf16.mxu0 0
    %444 = vmatpush1.bf16.msra.mxu0 %v433
    %445 = vmatprep.subr.bf16.mxu0 0
    %446 = vmatpush1.bf16.msra.mxu0 %v434
    %447 = vmatprep.subr.bf16.mxu0 0
    %448 = vmatpush1.bf16.msra.mxu0 0
    %449 = vmatprep.subr.bf16.mxu0 0
    %450 = vmatpush1.bf16.msra.mxu0 0
    %451 = vmatprep.subr.bf16.mxu0 0
    %452 = vmatpush1.bf16.msra.mxu0 0
    %453 = vmatprep.subr.bf16.mxu0 0
    %454 = vmatpush1.bf16.msra.mxu0 0
    %455 = vmatprep.subr.bf16.mxu0 0
    %456 = vmatpush1.bf16.msra.mxu0 0
    %457 = vmatprep.subr.bf16.mxu0 0
    %458 = vmatpush1.bf16.msra.mxu0 0
    %459 = vmatprep.subr.bf16.mxu0 0
    %460 = vmatpush1.bf16.msra.mxu0 0
    %461 = vmatprep.subr.bf16.mxu0 0
    %462 = vmatpush1.bf16.msra.mxu0 0
    %463 = vmatprep.subr.bf16.mxu0 0
    %464 = vmatpush1.bf16.msra.mxu0 0
    %465 = vmatprep.subr.bf16.mxu0 0
    %466 = vmatpush1.bf16.msra.mxu0 0
    %467 = vmatprep.subr.bf16.mxu0 0
    %468 = vmatpush1.bf16.msra.mxu0 0
    %469 = vmatprep.subr.bf16.mxu0 0
    %470 = vmatpush1.bf16.msra.mxu0 0
    %471 = vmatprep.mubr.bf16.mxu0 0
    %472 = vmatmul.mubr.bf16.gmra.mrb[0].mxu0 %v354
    %v473 = vpop.f32.mrb[0].mxu0
    %v474 = vadd.f32 %v414, %v473
    %v475 = vpop.f32.mrb[0].mxu0
    %v476 = vpop.f32.mrb[0].mxu0
    %v477 = vpop.f32.mrb[0].mxu0
    %478 = vdwg.mxu0
    %v479 = vxor.u32 %v474, 2147483648
    %v480 = vmul.f32 %v479, 1.442695
    %v481 = vpow.pop %v480
    %v482 = vadd.f32 %v481, 1.0
    %v483 = vrcp.pop %v482
    %v484 = vmul.f32 1.0, %v483
    %v485 = vld [vmem:[%s10] sm:$0xf]
    %v486 = vld [vmem:[%s10 + $0x4] sm:$0xf]
    %v487 = vld [vmem:[%s10 + $0x8] sm:$0xf]
    %v488 = vld [vmem:[%s10 + $0xc] sm:$0xf]
    %v489 = vld [vmem:[%s7 + $0xa] sm:$0x1]
    %v490 = vlaneseq
    %v491 = vshrl.u32 %v490, 7
    %v492 = vsub.s32 0, %v491
    %v493 = vrot.slane %v489, %v492
    %v498 = vunpack.c.l.b16 %v485
    %v499 = vunpack.c.l.b16 %v486
    %v500 = vunpack.c.l.b16 %v487
    %v501 = vunpack.c.l.b16 %v488
    %v502 = vpack.c.b16 %v499, %v498
    %v503 = vpack.c.b16 %v501, %v500
    %v506 = vsel %vm87, %v308, 0
    %508 = vmatprep.subr.bf16.mxu0 0
    %509 = vmatpush1.bf16.msra.mxu0 %v502
    %510 = vmatprep.subr.bf16.mxu0 0
    %511 = vmatpush1.bf16.msra.mxu0 %v503
    %512 = vmatprep.subr.bf16.mxu0 0
    %513 = vmatpush1.bf16.msra.mxu0 0
    %514 = vmatprep.subr.bf16.mxu0 0
    %515 = vmatpush1.bf16.msra.mxu0 0
    %516 = vmatprep.subr.bf16.mxu0 0
    %517 = vmatpush1.bf16.msra.mxu0 0
    %518 = vmatprep.subr.bf16.mxu0 0
    %519 = vmatpush1.bf16.msra.mxu0 0
    %520 = vmatprep.subr.bf16.mxu0 0
    %521 = vmatpush1.bf16.msra.mxu0 0
    %522 = vmatprep.subr.bf16.mxu0 0
    %523 = vmatpush1.bf16.msra.mxu0 0
    %524 = vmatprep.subr.bf16.mxu0 0
    %525 = vmatpush1.bf16.msra.mxu0 0
    %526 = vmatprep.subr.bf16.mxu0 0
    %527 = vmatpush1.bf16.msra.mxu0 0
    %528 = vmatprep.subr.bf16.mxu0 0
    %529 = vmatpush1.bf16.msra.mxu0 0
    %530 = vmatprep.subr.bf16.mxu0 0
    %531 = vmatpush1.bf16.msra.mxu0 0
    %532 = vmatprep.subr.bf16.mxu0 0
    %533 = vmatpush1.bf16.msra.mxu0 0
    %534 = vmatprep.subr.bf16.mxu0 0
    %535 = vmatpush1.bf16.msra.mxu0 0
    %536 = vmatprep.subr.bf16.mxu0 0
    %537 = vmatpush1.bf16.msra.mxu0 0
    %538 = vmatprep.subr.bf16.mxu0 0
    %539 = vmatpush1.bf16.msra.mxu0 0
    %540 = vmatprep.mubr.bf16.mxu0 0
    %541 = vmatmul.mubr.bf16.gmra.mrb[0].mxu0 %v506
    %v542 = vpop.f32.mrb[0].mxu0
    %v543 = vadd.f32 %v493, %v542
    %v544 = vpop.f32.mrb[0].mxu0
    %v545 = vpop.f32.mrb[0].mxu0
    %v546 = vpop.f32.mrb[0].mxu0
    %547 = vdwg.mxu0
    %v548 = vld [vmem:[%s11] sm:$0xf]
    %v549 = vld [vmem:[%s11 + $0x4] sm:$0xf]
    %v550 = vld [vmem:[%s11 + $0x8] sm:$0xf]
    %v551 = vld [vmem:[%s11 + $0xc] sm:$0xf]
    %v552 = vld [vmem:[%s7 + $0xb] sm:$0x1]
    %v553 = vlaneseq
    %v554 = vshrl.u32 %v553, 7
    %v555 = vsub.s32 0, %v554
    %v556 = vrot.slane %v552, %v555
    %v561 = vunpack.c.l.b16 %v548
    %v562 = vunpack.c.l.b16 %v549
    %v563 = vunpack.c.l.b16 %v550
    %v564 = vunpack.c.l.b16 %v551
    %v565 = vpack.c.b16 %v562, %v561
    %v566 = vpack.c.b16 %v564, %v563
    %v570 = vsel %vm87, %v309, 0
    %572 = vmatprep.subr.bf16.mxu0 0
    %573 = vmatpush1.bf16.msra.mxu0 %v565
    %574 = vmatprep.subr.bf16.mxu0 0
    %575 = vmatpush1.bf16.msra.mxu0 %v566
    %576 = vmatprep.subr.bf16.mxu0 0
    %577 = vmatpush1.bf16.msra.mxu0 0
    %578 = vmatprep.subr.bf16.mxu0 0
    %579 = vmatpush1.bf16.msra.mxu0 0
    %580 = vmatprep.subr.bf16.mxu0 0
    %581 = vmatpush1.bf16.msra.mxu0 0
    %582 = vmatprep.subr.bf16.mxu0 0
    %583 = vmatpush1.bf16.msra.mxu0 0
    %584 = vmatprep.subr.bf16.mxu0 0
    %585 = vmatpush1.bf16.msra.mxu0 0
    %586 = vmatprep.subr.bf16.mxu0 0
    %587 = vmatpush1.bf16.msra.mxu0 0
    %588 = vmatprep.subr.bf16.mxu0 0
    %589 = vmatpush1.bf16.msra.mxu0 0
    %590 = vmatprep.subr.bf16.mxu0 0
    %591 = vmatpush1.bf16.msra.mxu0 0
    %592 = vmatprep.subr.bf16.mxu0 0
    %593 = vmatpush1.bf16.msra.mxu0 0
    %594 = vmatprep.subr.bf16.mxu0 0
    %595 = vmatpush1.bf16.msra.mxu0 0
    %596 = vmatprep.subr.bf16.mxu0 0
    %597 = vmatpush1.bf16.msra.mxu0 0
    %598 = vmatprep.subr.bf16.mxu0 0
    %599 = vmatpush1.bf16.msra.mxu0 0
    %600 = vmatprep.subr.bf16.mxu0 0
    %601 = vmatpush1.bf16.msra.mxu0 0
    %602 = vmatprep.subr.bf16.mxu0 0
    %603 = vmatpush1.bf16.msra.mxu0 0
    %604 = vmatprep.mubr.bf16.mxu0 0
    %605 = vmatmul.mubr.bf16.gmra.mrb[0].mxu0 %v570
    %v606 = vpop.f32.mrb[0].mxu0
    %v607 = vadd.f32 %v556, %v606
    %v608 = vpop.f32.mrb[0].mxu0
    %v609 = vpop.f32.mrb[0].mxu0
    %v610 = vpop.f32.mrb[0].mxu0
    %611 = vdwg.mxu0
    %v612 = vmul.f32 %v401, %v607
    %v613 = vadd.f32 %v543, %v612
    %v614 = vtanh.pop %v613
    %v615 = vsub.f32 1.0, %v484
    %v616 = vmul.f32 %v615, %v614
    %v617 = vmul.f32 %v484, %v307
    %v618 = vadd.f32 %v616, %v617
    %v619 = vld [vmem:[%s7 + $0x6] sm:$0x1]
    %v620 = vld [vmem:[%s7 + $0x7] sm:$0x1]
    %v621 = vsel %vm87, %v618, 0.0
    %622 = vadd.xlane.f32.xlu0 %v621
    %v623 = vpop.xlane.xlu0 %622
    %v624 = vmul.f32 %v623, %v91
    %v625 = vmul.f32 %v618, %v618
    %v626 = vsel %vm87, %v625, 0.0
    %627 = vadd.xlane.f32.xlu0 %v626
    %v628 = vpop.xlane.xlu0 %627
    %v629 = vmul.f32 %v628, %v91
    %v630 = vmul.f32 %v624, %v624
    %v631 = vsub.f32 %v629, %v630
    %v632 = vsub.f32 %v618, %v624
    %v633 = vadd.f32 %v631, 1e-05
    %v634 = vrsqrt.pop %v633
    %v635 = vmul.f32 %v632, %v634
    %v636 = vlaneseq
    %v637 = vshrl.u32 %v636, 7
    %v638 = vsub.s32 0, %v637
    %v639 = vrot.slane %v619, %v638
    %v640 = vmul.f32 %v635, %v639
    %v641 = vlaneseq
    %v642 = vshrl.u32 %v641, 7
    %v643 = vsub.s32 0, %v642
    %v644 = vrot.slane %v620, %v643
    %v645 = vadd.f32 %v640, %v644
    %v646 = vpack.c.bf16 %v645, %v645
    %v647 = vld [vmem:[%s12] sm:$0xf]
    %v648 = vld [vmem:[%s12 + $0x4] sm:$0xf]
    %v649 = vld [vmem:[%s12 + $0x8] sm:$0xf]
    %v650 = vld [vmem:[%s12 + $0xc] sm:$0xf]
    %v651 = vld [vmem:[%s13] sm:$0x1]
    %v653 = vlaneseq
    %v654 = vshrl.u32 %v653, 7
    %v655 = vsub.s32 0, %v654
    %v656 = vrot.slane %v651, %v655
    %v662 = vunpack.c.l.b16 %v647
    %v663 = vunpack.c.l.b16 %v648
    %v664 = vunpack.c.l.b16 %v649
    %v665 = vunpack.c.l.b16 %v650
    %v666 = vpack.c.b16 %v663, %v662
    %v667 = vpack.c.b16 %v665, %v664
    %v671 = vsel %vm87, %v646, 0
    %673 = vmatprep.subr.bf16.mxu0 0
    %674 = vmatpush1.bf16.msra.mxu0 %v666
    %675 = vmatprep.subr.bf16.mxu0 0
    %676 = vmatpush1.bf16.msra.mxu0 %v667
    %677 = vmatprep.subr.bf16.mxu0 0
    %678 = vmatpush1.bf16.msra.mxu0 0
    %679 = vmatprep.subr.bf16.mxu0 0
    %680 = vmatpush1.bf16.msra.mxu0 0
    %681 = vmatprep.subr.bf16.mxu0 0
    %682 = vmatpush1.bf16.msra.mxu0 0
    %683 = vmatprep.subr.bf16.mxu0 0
    %684 = vmatpush1.bf16.msra.mxu0 0
    %685 = vmatprep.subr.bf16.mxu0 0
    %686 = vmatpush1.bf16.msra.mxu0 0
    %687 = vmatprep.subr.bf16.mxu0 0
    %688 = vmatpush1.bf16.msra.mxu0 0
    %689 = vmatprep.subr.bf16.mxu0 0
    %690 = vmatpush1.bf16.msra.mxu0 0
    %691 = vmatprep.subr.bf16.mxu0 0
    %692 = vmatpush1.bf16.msra.mxu0 0
    %693 = vmatprep.subr.bf16.mxu0 0
    %694 = vmatpush1.bf16.msra.mxu0 0
    %695 = vmatprep.subr.bf16.mxu0 0
    %696 = vmatpush1.bf16.msra.mxu0 0
    %697 = vmatprep.subr.bf16.mxu0 0
    %698 = vmatpush1.bf16.msra.mxu0 0
    %699 = vmatprep.subr.bf16.mxu0 0
    %700 = vmatpush1.bf16.msra.mxu0 0
    %701 = vmatprep.subr.bf16.mxu0 0
    %702 = vmatpush1.bf16.msra.mxu0 0
    %703 = vmatprep.subr.bf16.mxu0 0
    %704 = vmatpush1.bf16.msra.mxu0 0
    %705 = vmatprep.mubr.bf16.mxu0 0
    %706 = vmatmul.mubr.bf16.gmra.mrb[0].mxu0 %v671
    %v707 = vpop.f32.mrb[0].mxu0
    %v708 = vadd.f32 %v656, %v707
    %v709 = vpop.f32.mrb[0].mxu0
    %v710 = vpop.f32.mrb[0].mxu0
    %v711 = vpop.f32.mrb[0].mxu0
    %712 = vdwg.mxu0
    %v713 = vld [vmem:[#allocation7] sm:$0xff]
    %vm714 = vcmp.eq.f32.partialorder %v713, 0.0
    %v715 = vsel %vm714, -1e+10, %v708
    %v716 = vlaneseq
    %v717 = vand.u32 %v716, 127
    %718 = vmax.xlane.f32.xlu0 %v715
    %v719 = vpop.xlane.xlu0 %718
    %vm720 = vcmp.ge.f32.partialorder %v715, %v719
    %v721 = vsel %vm720, %v717, 128
    %v722 = vand.u32 %v721, 65535
    %v723 = vshra.s32 %v721, 16
    %v724 = vcvt.s32.f32 %v722
    %v725 = vcvt.s32.f32 %v723
    %726 = vmin.xlane.f32.xlu0 %v725
    %v727 = vpop.xlane.xlu0 %726
    %vm728 = vcmp.eq.f32.partialorder %v725, %v727
    %v729 = vsel %vm728, %v724, inf
    %730 = vmin.xlane.f32.xlu0 %v729
    %v731 = vpop.xlane.xlu0 %730
    %v732 = vcvt.f32.s32 %v731
    %v733 = vcvt.f32.s32 %v727
    %v734 = vshll.u32 %v733, 16
    %v735 = vadd.s32 %v734, %v732
    %v736 = vsub.f32 %v715, %v719
    %v737 = vmul.f32 %v736, 1.442695
    %v738 = vpow.pop %v737
    %739 = vadd.xlane.f32.xlu0 %v738
    %v740 = vpop.xlane.xlu0 %739
    %v741 = vlog2.pop %v740
    %v742 = vmul.f32 %v741, 0.6931472
    %vm743 = vcmp.eq.s32.totalorder %v717, %v735
    %v744 = vsub.f32 %v736, %v742
    %v745 = vsel %vm743, %v744, 0.0
    %746 = vadd.xlane.f32.xlu0 %v745
    %v747 = vpop.xlane.xlu0 %746
    %v748 = vcvt.s32.f32 %v735
    %750 = vrot.lane.b32.xlu0 %v618, 2
    %v751 = vpop.permute.xlu0 %750
    %vm753 = vcmask 7168
    %v754 = vsel %vm753, %v748, %v747
    %vm755 = vcmask 15360
    %v756 = vsel %vm755, %v754, %v751
    %vm757 = vcmask 277504
    %v758 = vsel %vm757, %v756, 0.0
    %759 = vst [vmem:[#allocation8] sm:$0xff] %v758
    // Predicated region
    $region70: #{tpu_custom_call.1} parent=1 // pred_check
      _
    $region71: #{tpu_custom_call.1} parent=1 // pred_check_branch
      %761 = sbr.rel (0) target = $region73
    $region72: #{tpu_custom_call.1} parent=1 // pred_region
      %s763 = ssub.s32 128, 128
      %764 = vsyncadd [#allocation4], %s763
      %s766 = sshll.u32 [#allocation8], 4
      %s767 = int_to_ptr.vmem [resolvable:$true] %s766
      %769 = dma.vmem_to_hbm [thread:$0]  %s767, 128, %s14, [#allocation4]
    $region73: #{tpu_custom_call.1} parent=1 // pred_fallthru
      _
    // Predicated region
    $region74: #{tpu_custom_call.1} parent=1 // pred_check
      _
    $region75: #{tpu_custom_call.1} parent=1 // pred_check_branch
      %771 = sbr.rel (0) target = $region77
    $region76: #{tpu_custom_call.1} parent=1 // pred_region
      %772 = dma.done [#allocation4], 128
    $region77: #{tpu_custom_call.1} parent=1 // pred_fallthru
      _
    %773 = vsyncpa [#allocation3], 1
    %774 = vsyncpa [#allocation6], 1
    %775 = vsyncpa [#allocation4], 1

</llo_original>
